<compile_context>
chip_gen: v7x
topology: tpu7x:2x2x1
jax: 0.10.0
libtpu: 0.0.40
codegen_flags: <defaults>
</compile_context>

<pallas_src>
import functools

import jax
import jax.numpy as jnp
import numpy as np
from jax.experimental import pallas as pl
from jax.experimental.pallas import tpu as pltpu


def _ceil_div(a: int, b: int) -> int:
    return -(-a // b)


def _ceil_to(v: int, m: int) -> int:
    return _ceil_div(v, m) * m


# ----------------------------- Pallas kernels ------------------------------ #
def _gap_kernel_single(x_ref, o_ref, *, inv_s: float):
    """Spatial extent fits in one tile: direct row-mean, no scratch/init."""
    o_ref[...] = (
        jnp.sum(x_ref[...].astype(jnp.float32), axis=1, keepdims=True) * inv_s
    ).astype(o_ref.dtype)


def _gap_kernel_multi(x_ref, o_ref, acc_ref, *, inv_s: float, rem: int):
    """Row-mean with the spatial axis tiled (reduction axis = last grid axis).

    `rem` (static) is S % TS; when nonzero only the last spatial tile is masked
    with jnp.where (NOT a mask-multiply) so garbage/NaN in the overhang columns
    can never pollute the accumulator.
    """
    s = pl.program_id(1)
    ns = pl.num_programs(1)

    @pl.when(s == 0)
    def _init():
        acc_ref[...] = jnp.zeros_like(acc_ref)

    def _accum(x):
        acc_ref[...] += jnp.sum(x.astype(jnp.float32), axis=1, keepdims=True)

    if rem == 0:  # S divides evenly into tiles: no masking code is even compiled
        _accum(x_ref[...])
    else:
        @pl.when(s < ns - 1)
        def _full():
            _accum(x_ref[...])

        @pl.when(s == ns - 1)
        def _tail():
            lane = jax.lax.broadcasted_iota(jnp.int32, x_ref.shape, dimension=1)
            _accum(jnp.where(lane < rem, x_ref[...], 0.0))

    @pl.when(s == ns - 1)
    def _finalize():
        o_ref[...] = (acc_ref[...] * inv_s).astype(o_ref.dtype)


# ------------------------------- wrapper ----------------------------------- #
def global_average_pooling(feat, *, target_tile_bytes: int = 8 * 1024 * 1024):
    """Pallas TPU equivalent of GlobalAveragePooling.forward: NCHW -> (N, C)."""
    N, C, H, W = feat.shape
    M, S = N * C, H * W
    x = feat.reshape(M, S)  # contiguous view of NCHW -> no data movement

    itemsize = x.dtype.itemsize
    budget = max(1024, target_tile_bytes // itemsize)  # elements per input tile

    # ---- spatial tile: keep the full row whenever >=8 rows fit the budget ----
    if 8 * S <= budget:
        TS = S                                             # full dim (contiguous DMA)
    else:
        TS = max(128, (budget // 8) // 128 * 128)          # lane-aligned chunk
    grid_s = _ceil_div(S, TS)
    rem = S % TS                                           # 0 when grid_s == 1 (TS == S)

    # ---- row tile from the byte budget -------------------------------------
    tm_budget = max(8, (budget // TS) // 8 * 8)
    if M <= tm_budget:
        if M >= 16:
            # Guarantee 2 blocks along the parallel axis so both TensorCores
            # (v7x megacore) get a share of the HBM traffic.
            TM = _ceil_to(_ceil_div(M, 2), 8)
        else:
            TM = M                                         # single full-dim block
    else:
        TM = tm_budget
    grid_m = _ceil_div(M, TM)

    inv_s = 1.0 / float(S)
    out_shape = jax.ShapeDtypeStruct((M, 1), feat.dtype)
    cost = pl.CostEstimate(
        flops=M * S,
        transcendentals=0,
        bytes_accessed=M * S * itemsize + M * itemsize,
    )
    cparams = dict(vmem_limit_bytes=40 * 1024 * 1024)

    if grid_s == 1:
        out = pl.pallas_call(
            functools.partial(_gap_kernel_single, inv_s=inv_s),
            grid=(grid_m,),
            in_specs=[pl.BlockSpec((TM, TS), lambda m: (m, 0))],
            out_specs=pl.BlockSpec((TM, 1), lambda m: (m, 0)),
            out_shape=out_shape,
            compiler_params=pltpu.CompilerParams(
                dimension_semantics=("parallel",), **cparams
            ),
            cost_estimate=cost,
        )(x)
    else:
        out = pl.pallas_call(
            functools.partial(_gap_kernel_multi, inv_s=inv_s, rem=rem),
            grid=(grid_m, grid_s),
            in_specs=[pl.BlockSpec((TM, TS), lambda m, s: (m, s))],
            out_specs=pl.BlockSpec((TM, 1), lambda m, s: (m, 0)),
            out_shape=out_shape,
            scratch_shapes=[pltpu.VMEM((TM, 1), jnp.float32)],
            compiler_params=pltpu.CompilerParams(
                dimension_semantics=("parallel", "arbitrary"), **cparams
            ),
            cost_estimate=cost,
        )(x)

    return out[:, 0].reshape(N, C)


# --------------------------------- main ------------------------------------ #
if __name__ == "__main__":
    key = jax.random.PRNGKey(0)

    fwd = jax.jit(global_average_pooling)
    # Tiny tile budget forces the multi-spatial-tile + tail-mask path on small data.
    fwd_tiny_tiles = jax.jit(
        functools.partial(global_average_pooling, target_tile_bytes=4096)
    )

    test_cases = [
        # (shape, dtype, wrapped_fn, atol, rtol)
        ((2, 4, 16, 16), jnp.float32, fwd, 1e-5, 1e-5),      # spec shape, single tile
        ((2, 6, 7, 7), jnp.float32, fwd, 1e-5, 1e-5),        # ragged spatial, full-dim block
        ((2, 64, 64, 64), jnp.float32, fwd, 1e-5, 1e-5),     # M=128 -> 2 parallel blocks
        ((3, 300, 10, 17), jnp.float32, fwd, 1e-5, 1e-5),    # ragged M boundary block, no pad
        ((2, 8, 7, 7), jnp.bfloat16, fwd, 1e-2, 1e-2),       # low-precision input path
        ((3, 300, 10, 17), jnp.float32, fwd_tiny_tiles, 1e-5, 1e-5),  # S-tiled + tail mask
    ]

    for idx, (shape, dtype, fn, atol, rtol) in enumerate(test_cases):
        k = jax.random.fold_in(key, idx)
        x = jax.random.normal(k, shape, jnp.float32).astype(dtype)

        out = jax.block_until_ready(fn(x))
        N, C, H, W = shape
        assert out.shape == (N, C), (out.shape, shape)
        assert out.dtype == dtype, (out.dtype, dtype)

        x_f32 = np.asarray(x.astype(jnp.float32))
        ref = x_f32.reshape(N, C, H * W).mean(axis=-1)
        got = np.asarray(out.astype(jnp.float32))
        np.testing.assert_allclose(got, ref, atol=atol, rtol=rtol)

    print("KERNEL_OK")
</pallas_src>

<mosaic_0001>
module attributes {stable_mosaic.version = 11 : i64} {
  func.func @_gap_kernel_single(%arg0: i32, %arg1: memref<8x256xf32, #tpu.memory_space<vmem>>, %arg2: memref<8x1xf32, #tpu.memory_space<vmem>>) attributes {dimension_semantics = [#tpu.dimension_semantics<parallel>], iteration_bounds = array<i64: 1>, scalar_prefetch = 0 : i64, scratch_operands = 0 : i64, tpu.core_type = #tpu.core_type<tc>, window_params = [{transform_indices = @transform_0, window_bounds = array<i64: 8, 256>}, {transform_indices = @transform_1, window_bounds = array<i64: 8, 1>}]} {
    %c0 = arith.constant 0 : index
    %c0_0 = arith.constant 0 : index
    %0 = vector.load %arg1[%c0, %c0_0] : memref<8x256xf32, #tpu.memory_space<vmem>>, vector<8x256xf32>
    %cst = arith.constant dense<0.000000e+00> : vector<8xf32>
    %1 = vector.multi_reduction <add>, %0, %cst [1] : vector<8x256xf32> to vector<8xf32>
    %2 = vector.shape_cast %1 : vector<8xf32> to vector<8x1xf32>
    %cst_1 = arith.constant 3.906250e-03 : f32
    %3 = vector.broadcast %cst_1 : f32 to vector<8x1xf32>
    %4 = arith.mulf %2, %3 : vector<8x1xf32>
    %c0_2 = arith.constant 0 : index
    %c0_3 = arith.constant 0 : index
    %5 = vector.load %arg2[%c0_2, %c0_3] : memref<8x1xf32, #tpu.memory_space<vmem>>, vector<8x1xf32>
    tpu.vector_store %arg2[%c0_2, %c0_3], %4 {strides = array<i32>} : memref<8x1xf32, #tpu.memory_space<vmem>>, vector<8x1xf32>,
    return
  }
  func.func @transform_0(%arg0: i32) -> (i32, i32) {
    %c0_i32 = arith.constant 0 : i32
    %c0_i32_0 = arith.constant 0 : i32
    return %arg0, %c0_i32 : i32, i32
  }
  func.func @transform_1(%arg0: i32) -> (i32, i32) {
    %c0_i32 = arith.constant 0 : i32
    %c0_i32_0 = arith.constant 0 : i32
    return %arg0, %c0_i32 : i32, i32
  }
}

</mosaic_0001>

<llo_original>
// kernel: squeeze.1
$region0: #{squeeze.1}
  %s0 = inlined_call_operand.vmem [shape: f32[8], index: 0, kind: input, shape index: {}]
  %s1 = inlined_call_operand.hbm [shape: f32[2,4], index: 1, kind: output, shape index: {}]
  $region1: #{squeeze.1} parent=0
    #allocation0 [shape = 'u8[1024]{0}', space=vmem, size = 0x400, scoped, tag = 'operand span for operand 1']
    #allocation1 [shape = 's32[1]{0}', space=sflag, size = 0x4, scoped, tag = 'scoped memory for squeeze.1']
    #allocation2 [shape = 'u8[4096]{0}', space=vmem, size = 0x1000, scoped, tag = 'scoped mem for output reshape']
    #allocation3 [shape = 'u8[4096]{0}', space=vmem, size = 0x1000, scoped, tag = 'scoped mem for input reshape']
    %2 = vsyncpa [#allocation1], 0
    %s4 = sshllo.u32 0, 1
    %v5 = vld [vmem:[%s0] sm:%s4]
    %6 = vst [vmem:[#allocation3] sm:%s4] %v5
    %v7 = vld [vmem:[#allocation3] sm:$0x1]
    %vm8 = vcmask 31744
    %9 = vst.msk [vmem:[#allocation2] sm:$0x1] %vm8, %v7
    %v10 = vld [vmem:[#allocation3] sm:$0x1]
    %11 = vrot.lane.b32.xlu0 %v10, 124
    %v12 = vpop.permute.xlu0 %11
    %vm13 = vcmask 31744
    %s14 = scalar_lea.vmem [#allocation2], 1
    %15 = vst.msk [vmem:[%s14] sm:$0x1] %vm13, %v12
    %s17 = sshllo.u32 0, 2
    %v19 = vld [vmem:[#allocation2] sm:%s17]
    %s20 = sshllo.u32 0, 2
    %21 = vst [vmem:[#allocation0] sm:%s20] %v19
    %s23 = ssub.s32 32, 32
    %24 = vsyncadd [#allocation1], %s23
    %s26 = sshll.u32 [#allocation0], 4
    %s27 = int_to_ptr.vmem [resolvable:$true] %s26
    %29 = dma.vmem_to_hbm [thread:$0]  %s27, 32, %s1, [#allocation1]
    %30 = dma.done [#allocation1], 32
    %31 = vsyncpa [#allocation1], 1

// kernel: global_average_pooling.1
$region0: #{global_average_pooling.1}
  #allocation0 [shape = 'u32[]', space=smem, size = 0x4, offset = 0x4, fixed_abs, tag = 'smem constant byte address 0x4 - core index']
  #allocation1 [shape = 'u32[144,128]{1,0:T(1,128)}', space=vmem, size = 0x12000, scoped, tag = 'internal scratch']
  %s0 = inlined_call_operand.vmem [shape: f32[8,256], index: 0, kind: input, shape index: {}]
  %s1 = inlined_call_operand.vmem [shape: f32[8,1], index: 1, kind: output, shape index: {}]
  %s2 = sld [smem:[#allocation0]]
  $region14: #{global_average_pooling.1} parent=0
    _
  %s4 = ssub.s32 1, %s2
  %s5 = scalar_select 0, %s4, %s2
  // Predicated region
  $region2: #{global_average_pooling.1} parent=0 // pred_check
    _
  $region3: #{global_average_pooling.1} parent=0 // pred_check_branch
    %7 = sbr.rel (0) target = $region5
  $region4: #{global_average_pooling.1} parent=0 // pred_region
    _
  $region5: #{global_average_pooling.1} parent=0 // pred_fallthru
    _
  %v8 = vld [vmem:[%s0] sm:$0xff]
  %v9 = vld [vmem:[%s0 + $0x8] sm:$0xff]
  %v10 = vadd.f32 %v8, %v9
  %11 = vadd.xlane.f32.xlu0 %v10
  %v12 = vpop.xlane.xlu0 %11
  %v13 = vmul.f32 %v12, 0.00390625
  %vm14 = vcmask 7168
  %15 = vst.msk [vmem:[%s1] sm:$0xff] %vm14, %v13
  // Predicated region
  $region6: #{global_average_pooling.1} parent=0 // pred_check
    _
  $region7: #{global_average_pooling.1} parent=0 // pred_check_branch
    %17 = sbr.rel (0) target = $region9
  $region8: #{global_average_pooling.1} parent=0 // pred_region
    _
  $region9: #{global_average_pooling.1} parent=0 // pred_fallthru
    _
  // Predicated region
  $region10: #{global_average_pooling.1} parent=0 // pred_check
    _
  $region11: #{global_average_pooling.1} parent=0 // pred_check_branch
    %19 = sbr.rel (0) target = $region13
  $region12: #{global_average_pooling.1} parent=0 // pred_region
    _
  $region13: #{global_average_pooling.1} parent=0 // pred_fallthru
    _

</llo_original>
